<compile_context>
chip_gen: v5e
topology: v5e:2x2
jax: 0.10.0
libtpu: 0.0.40
codegen_flags: <defaults>
</compile_context>

<pallas_src>
import functools

import jax
import jax.numpy as jnp
from jax.experimental import pallas as pl
from jax.experimental.pallas import tpu as pltpu


LANE = 128  # vreg lane width; pad feature dims to this
SUBLANE = 8


def _round_up(n: int, m: int) -> int:
    return ((n + m - 1) // m) * m


def _fused_mlp_kernel(*refs, num_layers: int, compute_dtype):
    """refs = (x_ref, w0, b0, w1, b1, ..., w{L-1}, b{L-1}, o_ref).

    x_ref : (tm, D0_pad)            activations for this batch tile
    w_l   : (Din_l_pad, Dout_l_pad) bf16 weights (resident across grid)
    b_l   : (1, Dout_l_pad)         f32 bias
    o_ref : (tm, D_last_pad)
    """
    x_ref = refs[0]
    o_ref = refs[-1]
    wb = refs[1:-1]

    h = x_ref[...].astype(compute_dtype)
    for i in range(num_layers):
        w = wb[2 * i][...]
        b = wb[2 * i + 1][...]
        acc = jnp.dot(h, w, preferred_element_type=jnp.float32)
        acc = acc + b  # f32 bias, broadcast (1, D) over rows
        if i < num_layers - 1:
            acc = jnp.maximum(acc, 0.0)  # ReLU in f32
            h = acc.astype(compute_dtype)
        else:
            o_ref[...] = acc.astype(o_ref.dtype)


def prepare_mlp_params(params, compute_dtype=jnp.bfloat16):
    """Zero-pad (in,out) weights / biases to lane multiples; weights -> bf16.

    params: list of (w, b) with w: (Din, Dout) f32, b: (Dout,) f32
    returns: list of (w_pad, b_pad) with
        w_pad: (round128(Din), round128(Dout)) compute_dtype
        b_pad: (1, round128(Dout)) f32
    """
    padded = []
    for w, b in params:
        din, dout = w.shape
        dinp, doutp = _round_up(din, LANE), _round_up(dout, LANE)
        w_pad = jnp.zeros((dinp, doutp), jnp.float32).at[:din, :dout].set(w)
        b_pad = jnp.zeros((1, doutp), jnp.float32).at[0, :dout].set(b)
        padded.append((w_pad.astype(compute_dtype), b_pad))
    return padded


def mlp_forward_pallas(x, params, *, compute_dtype=jnp.bfloat16):
    """Fused MLP forward.  x: (B, input_dim) f32, params as in init_mlp_params."""
    B, din = x.shape
    num_layers = len(params)
    dout = params[-1][0].shape[1]

    padded = prepare_mlp_params(params, compute_dtype)
    d0_pad = padded[0][0].shape[0]
    dlast_pad = padded[-1][0].shape[1]

    # Batch tile: at least sublane-aligned, capped so VMEM stays comfortable.
    tm = min(_round_up(B, SUBLANE), 256)
    b_pad = _round_up(B, tm)

    # Pad activations (rows beyond B and cols beyond din are zero).
    x_pad = jnp.zeros((b_pad, d0_pad), jnp.float32).at[:B, :din].set(x)

    # Sanity: padded weights + double-buffered activation tiles must fit VMEM.
    resident_bytes = sum(
        w.size * w.dtype.itemsize + b.size * b.dtype.itemsize for w, b in padded
    ) + 2 * 2 * tm * max(d0_pad, dlast_pad) * 4
    assert resident_bytes < (16 << 20), "MLP too large for fused kernel; tile K/N"

    # ---- specs ---------------------------------------------------------
    in_specs = [pl.BlockSpec((tm, d0_pad), lambda i: (i, 0))]
    flat_inputs = [x_pad]
    for w, b in padded:
        dinp, doutp = w.shape
        in_specs.append(pl.BlockSpec((dinp, doutp), lambda i: (0, 0)))
        in_specs.append(pl.BlockSpec((1, doutp), lambda i: (0, 0)))
        flat_inputs.append(w)
        flat_inputs.append(b)
    out_spec = pl.BlockSpec((tm, dlast_pad), lambda i: (i, 0))

    # ---- cost estimate -------------------------------------------------
    flops = sum(2 * b_pad * w.shape[0] * w.shape[1] for w, _ in padded)
    bytes_accessed = (
        x_pad.size * 4
        + sum(w.size * w.dtype.itemsize + b.size * 4 for w, b in padded)
        + b_pad * dlast_pad * 4
    )
    cost = pl.CostEstimate(
        flops=flops, transcendentals=0, bytes_accessed=bytes_accessed
    )

    kernel = functools.partial(
        _fused_mlp_kernel, num_layers=num_layers, compute_dtype=compute_dtype
    )

    out_pad = pl.pallas_call(
        kernel,
        out_shape=jax.ShapeDtypeStruct((b_pad, dlast_pad), jnp.float32),
        grid_spec=pltpu.PrefetchScalarGridSpec(
            num_scalar_prefetch=0,
            grid=(b_pad // tm,),
            in_specs=in_specs,
            out_specs=out_spec,
        ),
        compiler_params=pltpu.CompilerParams(
            dimension_semantics=("parallel",),
            vmem_limit_bytes=32 * 1024 * 1024,
        ),
        cost_estimate=cost,
    )(*flat_inputs)

    return out_pad[:B, :dout]


def init_mlp_params(key, input_dim, hidden_dim, output_dim, num_layers):
    """Deterministic init mirroring nn.Linear shapes.

    Weights stored as (in_dim, out_dim) (transpose of PyTorch's (out, in))
    so the kernel can do x @ W directly.
    """
    h = [hidden_dim] * (num_layers - 1)
    dims_in = [input_dim] + h
    dims_out = h + [output_dim]
    params = []
    for n, k in zip(dims_in, dims_out):
        key, wk, bk = jax.random.split(key, 3)
        bound = 1.0 / jnp.sqrt(jnp.float32(n))
        w = jax.random.uniform(wk, (n, k), jnp.float32, -bound, bound)
        b = jax.random.uniform(bk, (k,), jnp.float32, -bound, bound)
        params.append((w, b))
    return params


def mlp_reference_f32(x, params):
    num_layers = len(params)
    for i, (w, b) in enumerate(params):
        x = x @ w + b
        if i < num_layers - 1:
            x = jnp.maximum(x, 0.0)
    return x


def mlp_reference_bf16(x, params):
    """Reference matching the kernel's bf16-input / f32-accumulate math."""
    num_layers = len(params)
    h = x.astype(jnp.bfloat16)
    for i, (w, b) in enumerate(params):
        acc = jnp.dot(h, w.astype(jnp.bfloat16), preferred_element_type=jnp.float32)
        acc = acc + b
        if i < num_layers - 1:
            acc = jnp.maximum(acc, 0.0)
            h = acc.astype(jnp.bfloat16)
        else:
            return acc
    return h


if __name__ == "__main__":
    # DETR-style bbox-prediction head shapes: input_dim=hidden_dim, output 4,
    # 3 layers (kept small for the demo).
    B = 8
    input_dim = 16
    hidden_dim = 32
    output_dim = 4
    num_layers = 3

    key = jax.random.PRNGKey(0)
    key, xk = jax.random.split(key)
    x = jax.random.normal(xk, (B, input_dim), jnp.float32)
    params = init_mlp_params(key, input_dim, hidden_dim, output_dim, num_layers)

    out = mlp_forward_pallas(x, params)
    out = jax.block_until_ready(out)

    assert out.shape == (B, output_dim)

    ref_bf16 = mlp_reference_bf16(x, params)
    ref_f32 = mlp_reference_f32(x, params)
    assert jnp.allclose(out, ref_bf16, atol=2e-3, rtol=2e-3), "mismatch vs bf16 reference"
    assert jnp.allclose(out, ref_f32, atol=5e-2, rtol=5e-2), "mismatch vs f32 reference"

    print("KERNEL_OK")
</pallas_src>

<mosaic_0001>
module attributes {stable_mosaic.version = 11 : i64} {
  func.func @_fused_mlp_kernel(%arg0: i32, %arg1: memref<8x128xf32, #tpu.memory_space<vmem>>, %arg2: memref<128x128xbf16, #tpu.memory_space<vmem>>, %arg3: memref<1x128xf32, #tpu.memory_space<vmem>>, %arg4: memref<128x128xbf16, #tpu.memory_space<vmem>>, %arg5: memref<1x128xf32, #tpu.memory_space<vmem>>, %arg6: memref<128x128xbf16, #tpu.memory_space<vmem>>, %arg7: memref<1x128xf32, #tpu.memory_space<vmem>>, %arg8: memref<8x128xf32, #tpu.memory_space<vmem>>) attributes {dimension_semantics = [#tpu.dimension_semantics<parallel>], iteration_bounds = array<i64: 1>, scalar_prefetch = 0 : i64, scratch_operands = 0 : i64, tpu.core_type = #tpu.core_type<tc>, window_params = [{transform_indices = @transform_0, window_bounds = array<i64: 8, 128>}, {pipeline_mode = #tpu.pipeline_mode<synchronous>, transform_indices = @transform_1, window_bounds = array<i64: 128, 128>}, {pipeline_mode = #tpu.pipeline_mode<synchronous>, transform_indices = @transform_2, window_bounds = array<i64: 1, 128>}, {pipeline_mode = #tpu.pipeline_mode<synchronous>, transform_indices = @transform_3, window_bounds = array<i64: 128, 128>}, {pipeline_mode = #tpu.pipeline_mode<synchronous>, transform_indices = @transform_4, window_bounds = array<i64: 1, 128>}, {pipeline_mode = #tpu.pipeline_mode<synchronous>, transform_indices = @transform_5, window_bounds = array<i64: 128, 128>}, {pipeline_mode = #tpu.pipeline_mode<synchronous>, transform_indices = @transform_6, window_bounds = array<i64: 1, 128>}, {transform_indices = @transform_7, window_bounds = array<i64: 8, 128>}]} {
    %c0 = arith.constant 0 : index
    %c0_0 = arith.constant 0 : index
    %0 = vector.load %arg1[%c0, %c0_0] : memref<8x128xf32, #tpu.memory_space<vmem>>, vector<8x128xf32>
    %1 = arith.truncf %0 : vector<8x128xf32> to vector<8x128xbf16>
    %c0_1 = arith.constant 0 : index
    %c0_2 = arith.constant 0 : index
    %2 = vector.load %arg2[%c0_1, %c0_2] : memref<128x128xbf16, #tpu.memory_space<vmem>>, vector<128x128xbf16>
    %c0_3 = arith.constant 0 : index
    %c0_4 = arith.constant 0 : index
    %3 = vector.load %arg3[%c0_3, %c0_4] : memref<1x128xf32, #tpu.memory_space<vmem>>, vector<1x128xf32>
    %cst = arith.constant dense<0.000000e+00> : vector<8x128xf32>
    %4 = tpu.matmul %1, %2, %cst {dimension_numbers = #tpu.dot_dimension_numbers<[1], [0], [0], [1], [0, 0, 1, 1], [], []>} : vector<8x128xbf16>, vector<128x128xbf16>, vector<8x128xf32> -> vector<8x128xf32>
    %5 = vector.broadcast %3 : vector<1x128xf32> to vector<8x128xf32>
    %6 = arith.addf %4, %5 : vector<8x128xf32>
    %cst_5 = arith.constant 0.000000e+00 : f32
    %7 = vector.broadcast %cst_5 : f32 to vector<8x128xf32>
    %8 = arith.maximumf %6, %7 : vector<8x128xf32>
    %9 = arith.truncf %8 : vector<8x128xf32> to vector<8x128xbf16>
    %c0_6 = arith.constant 0 : index
    %c0_7 = arith.constant 0 : index
    %10 = vector.load %arg4[%c0_6, %c0_7] : memref<128x128xbf16, #tpu.memory_space<vmem>>, vector<128x128xbf16>
    %c0_8 = arith.constant 0 : index
    %c0_9 = arith.constant 0 : index
    %11 = vector.load %arg5[%c0_8, %c0_9] : memref<1x128xf32, #tpu.memory_space<vmem>>, vector<1x128xf32>
    %cst_10 = arith.constant dense<0.000000e+00> : vector<8x128xf32>
    %12 = tpu.matmul %9, %10, %cst_10 {dimension_numbers = #tpu.dot_dimension_numbers<[1], [0], [0], [1], [0, 0, 1, 1], [], []>} : vector<8x128xbf16>, vector<128x128xbf16>, vector<8x128xf32> -> vector<8x128xf32>
    %13 = vector.broadcast %11 : vector<1x128xf32> to vector<8x128xf32>
    %14 = arith.addf %12, %13 : vector<8x128xf32>
    %cst_11 = arith.constant 0.000000e+00 : f32
    %15 = vector.broadcast %cst_11 : f32 to vector<8x128xf32>
    %16 = arith.maximumf %14, %15 : vector<8x128xf32>
    %17 = arith.truncf %16 : vector<8x128xf32> to vector<8x128xbf16>
    %c0_12 = arith.constant 0 : index
    %c0_13 = arith.constant 0 : index
    %18 = vector.load %arg6[%c0_12, %c0_13] : memref<128x128xbf16, #tpu.memory_space<vmem>>, vector<128x128xbf16>
    %c0_14 = arith.constant 0 : index
    %c0_15 = arith.constant 0 : index
    %19 = vector.load %arg7[%c0_14, %c0_15] : memref<1x128xf32, #tpu.memory_space<vmem>>, vector<1x128xf32>
    %cst_16 = arith.constant dense<0.000000e+00> : vector<8x128xf32>
    %20 = tpu.matmul %17, %18, %cst_16 {dimension_numbers = #tpu.dot_dimension_numbers<[1], [0], [0], [1], [0, 0, 1, 1], [], []>} : vector<8x128xbf16>, vector<128x128xbf16>, vector<8x128xf32> -> vector<8x128xf32>
    %21 = vector.broadcast %19 : vector<1x128xf32> to vector<8x128xf32>
    %22 = arith.addf %20, %21 : vector<8x128xf32>
    %c0_17 = arith.constant 0 : index
    %c0_18 = arith.constant 0 : index
    %23 = vector.load %arg8[%c0_17, %c0_18] : memref<8x128xf32, #tpu.memory_space<vmem>>, vector<8x128xf32>
    tpu.vector_store %arg8[%c0_17, %c0_18], %22 {strides = array<i32>} : memref<8x128xf32, #tpu.memory_space<vmem>>, vector<8x128xf32>,
    return
  }
  func.func @transform_0(%arg0: i32) -> (i32, i32) {
    %c0_i32 = arith.constant 0 : i32
    %c0_i32_0 = arith.constant 0 : i32
    return %arg0, %c0_i32 : i32, i32
  }
  func.func @transform_1(%arg0: i32) -> (i32, i32) {
    %c0_i32 = arith.constant 0 : i32
    %c0_i32_0 = arith.constant 0 : i32
    %c0_i32_1 = arith.constant 0 : i32
    return %c0_i32, %c0_i32_0 : i32, i32
  }
  func.func @transform_2(%arg0: i32) -> (i32, i32) {
    %c0_i32 = arith.constant 0 : i32
    %c0_i32_0 = arith.constant 0 : i32
    %c0_i32_1 = arith.constant 0 : i32
    return %c0_i32, %c0_i32_0 : i32, i32
  }
  func.func @transform_3(%arg0: i32) -> (i32, i32) {
    %c0_i32 = arith.constant 0 : i32
    %c0_i32_0 = arith.constant 0 : i32
    %c0_i32_1 = arith.constant 0 : i32
    return %c0_i32, %c0_i32_0 : i32, i32
  }
  func.func @transform_4(%arg0: i32) -> (i32, i32) {
    %c0_i32 = arith.constant 0 : i32
    %c0_i32_0 = arith.constant 0 : i32
    %c0_i32_1 = arith.constant 0 : i32
    return %c0_i32, %c0_i32_0 : i32, i32
  }
  func.func @transform_5(%arg0: i32) -> (i32, i32) {
    %c0_i32 = arith.constant 0 : i32
    %c0_i32_0 = arith.constant 0 : i32
    %c0_i32_1 = arith.constant 0 : i32
    return %c0_i32, %c0_i32_0 : i32, i32
  }
  func.func @transform_6(%arg0: i32) -> (i32, i32) {
    %c0_i32 = arith.constant 0 : i32
    %c0_i32_0 = arith.constant 0 : i32
    %c0_i32_1 = arith.constant 0 : i32
    return %c0_i32, %c0_i32_0 : i32, i32
  }
  func.func @transform_7(%arg0: i32) -> (i32, i32) {
    %c0_i32 = arith.constant 0 : i32
    %c0_i32_0 = arith.constant 0 : i32
    return %arg0, %c0_i32 : i32, i32
  }
}

</mosaic_0001>

<llo_original>
// kernel: tpu_custom_call.1
$region0: #{tpu_custom_call.1}
  #allocation0 [shape = 'u32[]', space=smem, size = 0x4, offset = 0x4, fixed_abs, tag = 'smem constant byte address 0x4 - core index']
  #allocation1 [shape = 'u32[72,128]{1,0:T(1,128)}', space=vmem, size = 0x9000, scoped, tag = 'internal scratch']
  %s0 = inlined_call_operand.hbm [shape: f32[8,128], index: 0, kind: input, shape index: {}]
  %s1 = inlined_call_operand.hbm [shape: bf16[128,128], index: 1, kind: input, shape index: {}]
  %s2 = inlined_call_operand.vmem [shape: f32[1,128], index: 2, kind: input, shape index: {}]
  %s3 = inlined_call_operand.hbm [shape: bf16[128,128], index: 3, kind: input, shape index: {}]
  %s4 = inlined_call_operand.vmem [shape: f32[1,128], index: 4, kind: input, shape index: {}]
  %s5 = inlined_call_operand.hbm [shape: bf16[128,128], index: 5, kind: input, shape index: {}]
  %s6 = inlined_call_operand.vmem [shape: f32[1,128], index: 6, kind: input, shape index: {}]
  %s7 = inlined_call_operand.hbm [shape: f32[8,128], index: 7, kind: output, shape index: {}]
  %s8 = sld [smem:[#allocation0]]
  $region54: #{tpu_custom_call.1} parent=0
    _
  %s10 = ssub.s32 1, %s8
  %s11 = scalar_select 0, %s10, %s8
  $region1: #{tpu_custom_call.1} parent=0
    #allocation2 [shape = 'u8[4096]{0}', space=vmem, size = 0x1000, scoped, tag = 'input window, operand 0, single buffered']
    #allocation3 [shape = 's32[1]{0}', space=sflag, size = 0x4, scoped, tag = 'scoped memory for tpu_custom_call.1']
    #allocation4 [shape = 's32[1]{0}', space=sflag, size = 0x4, scoped, tag = 'scoped memory for tpu_custom_call.1']
    #allocation5 [shape = 'u8[32768]{0}', space=vmem, size = 0x8000, scoped, tag = 'input window, operand 1, single buffered']
    #allocation6 [shape = 's32[1]{0}', space=sflag, size = 0x4, scoped, tag = 'scoped memory for tpu_custom_call.1']
    #allocation7 [shape = 'u8[32768]{0}', space=vmem, size = 0x8000, scoped, tag = 'input window, operand 3, single buffered']
    #allocation8 [shape = 'u8[32768]{0}', space=vmem, size = 0x8000, scoped, tag = 'input window, operand 5, single buffered']
    #allocation9 [shape = 's32[1]{0}', space=sflag, size = 0x4, scoped, tag = 'scoped memory for tpu_custom_call.1']
    #allocation10 [shape = 'u8[4096]{0}', space=vmem, size = 0x1000, scoped, tag = 'output window, operand 0, single buffered']
    %12 = vsyncpa [#allocation3], 0
    %13 = vsyncpa [#allocation6], 0
    %14 = vsyncpa [#allocation9], 0
    %15 = vsyncpa [#allocation4], 0
    // Predicated region
    $region2: #{tpu_custom_call.1} parent=1 // pred_check
      _
    $region3: #{tpu_custom_call.1} parent=1 // pred_check_branch
      %17 = sbr.rel (0) target = $region5
    $region4: #{tpu_custom_call.1} parent=1 // pred_region
      %19 = vsyncadd [#allocation3], 0
      %s21 = sshll.u32 %s0, 4
      %s22 = int_to_ptr.hbm [resolvable:$true] %s21
      %s23 = sshll.u32 [#allocation2], 4
      %s24 = int_to_ptr.vmem [resolvable:$true] %s23
      %26 = dma.hbm_to_vmem [thread:$0]  %s22, 128, %s24, [#allocation3]
    $region5: #{tpu_custom_call.1} parent=1 // pred_fallthru
      _
    // Predicated region
    $region6: #{tpu_custom_call.1} parent=1 // pred_check
      _
    $region7: #{tpu_custom_call.1} parent=1 // pred_check_branch
      %28 = sbr.rel (0) target = $region9
    $region8: #{tpu_custom_call.1} parent=1 // pred_region
      %30 = vsyncadd [#allocation6], 0
      %s31 = sshll.u32 %s1, 4
      %s32 = int_to_ptr.hbm [resolvable:$true] %s31
      %s33 = sshll.u32 [#allocation5], 4
      %s34 = int_to_ptr.vmem [resolvable:$true] %s33
      %39 = dma.hbm_to_vmem [thread:$0]  %s32, 1024, %s34, [#allocation6], 64, 64, 4
    $region9: #{tpu_custom_call.1} parent=1 // pred_fallthru
      _
    // Predicated region
    $region10: #{tpu_custom_call.1} parent=1 // pred_check
      _
    $region11: #{tpu_custom_call.1} parent=1 // pred_check_branch
      %41 = sbr.rel (0) target = $region13
    $region12: #{tpu_custom_call.1} parent=1 // pred_region
      _
    $region13: #{tpu_custom_call.1} parent=1 // pred_fallthru
      _
    // Predicated region
    $region14: #{tpu_custom_call.1} parent=1 // pred_check
      _
    $region15: #{tpu_custom_call.1} parent=1 // pred_check_branch
      %43 = sbr.rel (0) target = $region17
    $region16: #{tpu_custom_call.1} parent=1 // pred_region
      %45 = vsyncadd [#allocation6], 0
      %s46 = sshll.u32 %s3, 4
      %s47 = int_to_ptr.hbm [resolvable:$true] %s46
      %s48 = sshll.u32 [#allocation7], 4
      %s49 = int_to_ptr.vmem [resolvable:$true] %s48
      %54 = dma.hbm_to_vmem [thread:$0]  %s47, 1024, %s49, [#allocation6], 64, 64, 4
    $region17: #{tpu_custom_call.1} parent=1 // pred_fallthru
      _
    // Predicated region
    $region18: #{tpu_custom_call.1} parent=1 // pred_check
      _
    $region19: #{tpu_custom_call.1} parent=1 // pred_check_branch
      %56 = sbr.rel (0) target = $region21
    $region20: #{tpu_custom_call.1} parent=1 // pred_region
      _
    $region21: #{tpu_custom_call.1} parent=1 // pred_fallthru
      _
    // Predicated region
    $region22: #{tpu_custom_call.1} parent=1 // pred_check
      _
    $region23: #{tpu_custom_call.1} parent=1 // pred_check_branch
      %58 = sbr.rel (0) target = $region25
    $region24: #{tpu_custom_call.1} parent=1 // pred_region
      %60 = vsyncadd [#allocation9], 0
      %s61 = sshll.u32 %s5, 4
      %s62 = int_to_ptr.hbm [resolvable:$true] %s61
      %s63 = sshll.u32 [#allocation8], 4
      %s64 = int_to_ptr.vmem [resolvable:$true] %s63
      %69 = dma.hbm_to_vmem [thread:$0]  %s62, 1024, %s64, [#allocation9], 64, 64, 4
    $region25: #{tpu_custom_call.1} parent=1 // pred_fallthru
      _
    // Predicated region
    $region26: #{tpu_custom_call.1} parent=1 // pred_check
      _
    $region27: #{tpu_custom_call.1} parent=1 // pred_check_branch
      %71 = sbr.rel (0) target = $region29
    $region28: #{tpu_custom_call.1} parent=1 // pred_region
      _
    $region29: #{tpu_custom_call.1} parent=1 // pred_fallthru
      _
    // Predicated region
    $region30: #{tpu_custom_call.1} parent=1 // pred_check
      _
    $region31: #{tpu_custom_call.1} parent=1 // pred_check_branch
      %73 = sbr.rel (0) target = $region33
    $region32: #{tpu_custom_call.1} parent=1 // pred_region
      %75 = dma.done [#allocation3], 128
    $region33: #{tpu_custom_call.1} parent=1 // pred_fallthru
      _
    // Predicated region
    $region34: #{tpu_custom_call.1} parent=1 // pred_check
      _
    $region35: #{tpu_custom_call.1} parent=1 // pred_check_branch
      %77 = sbr.rel (0) target = $region37
    $region36: #{tpu_custom_call.1} parent=1 // pred_region
      %79 = dma.done [#allocation6], 1024
    $region37: #{tpu_custom_call.1} parent=1 // pred_fallthru
      _
    // Predicated region
    $region38: #{tpu_custom_call.1} parent=1 // pred_check
      _
    $region39: #{tpu_custom_call.1} parent=1 // pred_check_branch
      %81 = sbr.rel (0) target = $region41
    $region40: #{tpu_custom_call.1} parent=1 // pred_region
      %83 = dma.done [#allocation6], 1024
    $region41: #{tpu_custom_call.1} parent=1 // pred_fallthru
      _
    // Predicated region
    $region42: #{tpu_custom_call.1} parent=1 // pred_check
      _
    $region43: #{tpu_custom_call.1} parent=1 // pred_check_branch
      %85 = sbr.rel (0) target = $region45
    $region44: #{tpu_custom_call.1} parent=1 // pred_region
      %87 = dma.done [#allocation9], 1024
    $region45: #{tpu_custom_call.1} parent=1 // pred_fallthru
      _
    %v88 = vld [vmem:[#allocation2] sm:$0xff]
    %v89 = vpack.c.bf16 %v88, %v88
    %v90 = vld [vmem:[#allocation5] sm:$0xf]
    %v91 = vld [vmem:[#allocation5 + $0x4] sm:$0xf]
    %v92 = vld [vmem:[#allocation5 + $0x8] sm:$0xf]
    %v93 = vld [vmem:[#allocation5 + $0xc] sm:$0xf]
    %v94 = vld [vmem:[#allocation5 + $0x10] sm:$0xf]
    %v95 = vld [vmem:[#allocation5 + $0x14] sm:$0xf]
    %v96 = vld [vmem:[#allocation5 + $0x18] sm:$0xf]
    %v97 = vld [vmem:[#allocation5 + $0x1c] sm:$0xf]
    %v98 = vld [vmem:[#allocation5 + $0x20] sm:$0xf]
    %v99 = vld [vmem:[#allocation5 + $0x24] sm:$0xf]
    %v100 = vld [vmem:[#allocation5 + $0x28] sm:$0xf]
    %v101 = vld [vmem:[#allocation5 + $0x2c] sm:$0xf]
    %v102 = vld [vmem:[#allocation5 + $0x30] sm:$0xf]
    %v103 = vld [vmem:[#allocation5 + $0x34] sm:$0xf]
    %v104 = vld [vmem:[#allocation5 + $0x38] sm:$0xf]
    %v105 = vld [vmem:[#allocation5 + $0x3c] sm:$0xf]
    %v106 = vld [vmem:[%s2] sm:$0x1]
    %v108 = vperm.slane %v106, 0
    %v126 = vunpack.c.l.b16 %v90
    %v127 = vunpack.c.l.b16 %v91
    %v128 = vunpack.c.l.b16 %v92
    %v129 = vunpack.c.l.b16 %v93
    %v130 = vunpack.c.l.b16 %v94
    %v131 = vunpack.c.l.b16 %v95
    %v132 = vunpack.c.l.b16 %v96
    %v133 = vunpack.c.l.b16 %v97
    %v134 = vunpack.c.l.b16 %v98
    %v135 = vunpack.c.l.b16 %v99
    %v136 = vunpack.c.l.b16 %v100
    %v137 = vunpack.c.l.b16 %v101
    %v138 = vunpack.c.l.b16 %v102
    %v139 = vunpack.c.l.b16 %v103
    %v140 = vunpack.c.l.b16 %v104
    %v141 = vunpack.c.l.b16 %v105
    %v142 = vpack.c.b16 %v127, %v126
    %v143 = vpack.c.b16 %v129, %v128
    %v144 = vpack.c.b16 %v131, %v130
    %v145 = vpack.c.b16 %v133, %v132
    %v146 = vpack.c.b16 %v135, %v134
    %v147 = vpack.c.b16 %v137, %v136
    %v148 = vpack.c.b16 %v139, %v138
    %v149 = vpack.c.b16 %v141, %v140
    %158 = vmatpush.bf16.msra.mxu0 %v149
    %159 = vmatpush.bf16.msra.mxu0 %v148
    %160 = vmatpush.bf16.msra.mxu0 %v147
    %161 = vmatpush.bf16.msra.mxu0 %v146
    %162 = vmatpush.bf16.msra.mxu0 %v145
    %163 = vmatpush.bf16.msra.mxu0 %v144
    %164 = vmatpush.bf16.msra.mxu0 %v143
    %165 = vmatpush.bf16.msra.mxu0 %v142
    %166 = vmatmul.bf16.gmra.mxu0 %v89
    %v167 = vpop.f32.mrf.mxu0
    %v168 = vadd.f32 %v108, %v167
    %v169 = vpop.f32.mrf.mxu0
    %170 = vdwg.mxu0
    %v171 = vmax.f32 %v168, 0.0
    %v172 = vpack.c.bf16 %v171, %v171
    %v173 = vld [vmem:[#allocation7] sm:$0xf]
    %v174 = vld [vmem:[#allocation7 + $0x4] sm:$0xf]
    %v175 = vld [vmem:[#allocation7 + $0x8] sm:$0xf]
    %v176 = vld [vmem:[#allocation7 + $0xc] sm:$0xf]
    %v177 = vld [vmem:[#allocation7 + $0x10] sm:$0xf]
    %v178 = vld [vmem:[#allocation7 + $0x14] sm:$0xf]
    %v179 = vld [vmem:[#allocation7 + $0x18] sm:$0xf]
    %v180 = vld [vmem:[#allocation7 + $0x1c] sm:$0xf]
    %v181 = vld [vmem:[#allocation7 + $0x20] sm:$0xf]
    %v182 = vld [vmem:[#allocation7 + $0x24] sm:$0xf]
    %v183 = vld [vmem:[#allocation7 + $0x28] sm:$0xf]
    %v184 = vld [vmem:[#allocation7 + $0x2c] sm:$0xf]
    %v185 = vld [vmem:[#allocation7 + $0x30] sm:$0xf]
    %v186 = vld [vmem:[#allocation7 + $0x34] sm:$0xf]
    %v187 = vld [vmem:[#allocation7 + $0x38] sm:$0xf]
    %v188 = vld [vmem:[#allocation7 + $0x3c] sm:$0xf]
    %v189 = vld [vmem:[%s4] sm:$0x1]
    %v191 = vperm.slane %v189, 0
    %v209 = vunpack.c.l.b16 %v173
    %v210 = vunpack.c.l.b16 %v174
    %v211 = vunpack.c.l.b16 %v175
    %v212 = vunpack.c.l.b16 %v176
    %v213 = vunpack.c.l.b16 %v177
    %v214 = vunpack.c.l.b16 %v178
    %v215 = vunpack.c.l.b16 %v179
    %v216 = vunpack.c.l.b16 %v180
    %v217 = vunpack.c.l.b16 %v181
    %v218 = vunpack.c.l.b16 %v182
    %v219 = vunpack.c.l.b16 %v183
    %v220 = vunpack.c.l.b16 %v184
    %v221 = vunpack.c.l.b16 %v185
    %v222 = vunpack.c.l.b16 %v186
    %v223 = vunpack.c.l.b16 %v187
    %v224 = vunpack.c.l.b16 %v188
    %v225 = vpack.c.b16 %v210, %v209
    %v226 = vpack.c.b16 %v212, %v211
    %v227 = vpack.c.b16 %v214, %v213
    %v228 = vpack.c.b16 %v216, %v215
    %v229 = vpack.c.b16 %v218, %v217
    %v230 = vpack.c.b16 %v220, %v219
    %v231 = vpack.c.b16 %v222, %v221
    %v232 = vpack.c.b16 %v224, %v223
    %241 = vmatpush.bf16.msra.mxu0 %v232
    %242 = vmatpush.bf16.msra.mxu0 %v231
    %243 = vmatpush.bf16.msra.mxu0 %v230
    %244 = vmatpush.bf16.msra.mxu0 %v229
    %245 = vmatpush.bf16.msra.mxu0 %v228
    %246 = vmatpush.bf16.msra.mxu0 %v227
    %247 = vmatpush.bf16.msra.mxu0 %v226
    %248 = vmatpush.bf16.msra.mxu0 %v225
    %249 = vmatmul.bf16.gmra.mxu0 %v172
    %v250 = vpop.f32.mrf.mxu0
    %v251 = vadd.f32 %v191, %v250
    %v252 = vpop.f32.mrf.mxu0
    %253 = vdwg.mxu0
    %v254 = vmax.f32 %v251, 0.0
    %v255 = vpack.c.bf16 %v254, %v254
    %v256 = vld [vmem:[#allocation8] sm:$0xf]
    %v257 = vld [vmem:[#allocation8 + $0x4] sm:$0xf]
    %v258 = vld [vmem:[#allocation8 + $0x8] sm:$0xf]
    %v259 = vld [vmem:[#allocation8 + $0xc] sm:$0xf]
    %v260 = vld [vmem:[#allocation8 + $0x10] sm:$0xf]
    %v261 = vld [vmem:[#allocation8 + $0x14] sm:$0xf]
    %v262 = vld [vmem:[#allocation8 + $0x18] sm:$0xf]
    %v263 = vld [vmem:[#allocation8 + $0x1c] sm:$0xf]
    %v264 = vld [vmem:[#allocation8 + $0x20] sm:$0xf]
    %v265 = vld [vmem:[#allocation8 + $0x24] sm:$0xf]
    %v266 = vld [vmem:[#allocation8 + $0x28] sm:$0xf]
    %v267 = vld [vmem:[#allocation8 + $0x2c] sm:$0xf]
    %v268 = vld [vmem:[#allocation8 + $0x30] sm:$0xf]
    %v269 = vld [vmem:[#allocation8 + $0x34] sm:$0xf]
    %v270 = vld [vmem:[#allocation8 + $0x38] sm:$0xf]
    %v271 = vld [vmem:[#allocation8 + $0x3c] sm:$0xf]
    %v272 = vld [vmem:[%s6] sm:$0x1]
    %v274 = vperm.slane %v272, 0
    %v292 = vunpack.c.l.b16 %v256
    %v293 = vunpack.c.l.b16 %v257
    %v294 = vunpack.c.l.b16 %v258
    %v295 = vunpack.c.l.b16 %v259
    %v296 = vunpack.c.l.b16 %v260
    %v297 = vunpack.c.l.b16 %v261
    %v298 = vunpack.c.l.b16 %v262
    %v299 = vunpack.c.l.b16 %v263
    %v300 = vunpack.c.l.b16 %v264
    %v301 = vunpack.c.l.b16 %v265
    %v302 = vunpack.c.l.b16 %v266
    %v303 = vunpack.c.l.b16 %v267
    %v304 = vunpack.c.l.b16 %v268
    %v305 = vunpack.c.l.b16 %v269
    %v306 = vunpack.c.l.b16 %v270
    %v307 = vunpack.c.l.b16 %v271
    %v308 = vpack.c.b16 %v293, %v292
    %v309 = vpack.c.b16 %v295, %v294
    %v310 = vpack.c.b16 %v297, %v296
    %v311 = vpack.c.b16 %v299, %v298
    %v312 = vpack.c.b16 %v301, %v300
    %v313 = vpack.c.b16 %v303, %v302
    %v314 = vpack.c.b16 %v305, %v304
    %v315 = vpack.c.b16 %v307, %v306
    %324 = vmatpush.bf16.msra.mxu0 %v315
    %325 = vmatpush.bf16.msra.mxu0 %v314
    %326 = vmatpush.bf16.msra.mxu0 %v313
    %327 = vmatpush.bf16.msra.mxu0 %v312
    %328 = vmatpush.bf16.msra.mxu0 %v311
    %329 = vmatpush.bf16.msra.mxu0 %v310
    %330 = vmatpush.bf16.msra.mxu0 %v309
    %331 = vmatpush.bf16.msra.mxu0 %v308
    %332 = vmatmul.bf16.gmra.mxu0 %v255
    %v333 = vpop.f32.mrf.mxu0
    %v334 = vadd.f32 %v274, %v333
    %v335 = vpop.f32.mrf.mxu0
    %336 = vdwg.mxu0
    %337 = vst [vmem:[#allocation10] sm:$0xff] %v334
    // Predicated region
    $region46: #{tpu_custom_call.1} parent=1 // pred_check
      _
    $region47: #{tpu_custom_call.1} parent=1 // pred_check_branch
      %339 = sbr.rel (0) target = $region49
    $region48: #{tpu_custom_call.1} parent=1 // pred_region
      %341 = vsyncadd [#allocation4], 0
      %s343 = sshll.u32 [#allocation10], 4
      %s344 = int_to_ptr.vmem [resolvable:$true] %s343
      %s345 = sshll.u32 %s7, 4
      %s346 = int_to_ptr.hbm [resolvable:$true] %s345
      %348 = dma.vmem_to_hbm [thread:$0]  %s344, 128, %s346, [#allocation4]
    $region49: #{tpu_custom_call.1} parent=1 // pred_fallthru
      _
    // Predicated region
    $region50: #{tpu_custom_call.1} parent=1 // pred_check
      _
    $region51: #{tpu_custom_call.1} parent=1 // pred_check_branch
      %350 = sbr.rel (0) target = $region53
    $region52: #{tpu_custom_call.1} parent=1 // pred_region
      %352 = dma.done [#allocation4], 128
    $region53: #{tpu_custom_call.1} parent=1 // pred_fallthru
      _
    %353 = vsyncpa [#allocation3], 1
    %354 = vsyncpa [#allocation6], 1
    %355 = vsyncpa [#allocation9], 1
    %356 = vsyncpa [#allocation4], 1

</llo_original>
